<compile_context>
chip_gen: v7x
topology: tpu7x:2x2x1
jax: 0.10.0
libtpu: 0.0.40
codegen_flags: <defaults>
</compile_context>

<pallas_src>
import functools

import jax
import jax.numpy as jnp
from jax.experimental import pallas as pl
from jax.experimental.pallas import tpu as pltpu


def _focal_tversky_partial_kernel(x_ref, lbl_ref, tp_ref, ps_ref, cnt_ref, *,
                                  n_chunks, chunk, acc_w, s_total, tile_s,
                                  need_mask):
    """Accumulates per-batch {tp, sum_p, cnt} partial sums into the resident
    output blocks.  x_ref: (C, tile_s) logits; lbl_ref: (1, tile_s) int labels;
    tp/ps/cnt refs: (C, acc_w) f32 accumulators (output blocks, resident across
    the spatial grid axis)."""
    s = pl.program_id(1)
    c = x_ref.shape[0]

    @pl.when(s == 0)
    def _():
        tp_ref[...] = jnp.zeros_like(tp_ref)
        ps_ref[...] = jnp.zeros_like(ps_ref)
        cnt_ref[...] = jnp.zeros_like(cnt_ref)

    def fold(a):
        # (C, chunk) -> (C, acc_w) using vreg-aligned static lane slices
        # (VPU adds only, no XLU cross-lane reduce in the hot loop).
        if chunk == acc_w:
            return a
        if chunk % acc_w == 0:
            out = a[:, :acc_w]
            for j in range(1, chunk // acc_w):
                out = out + a[:, j * acc_w:(j + 1) * acc_w]
            return out
        return jnp.sum(a, axis=-1, keepdims=True)       # acc_w == 1 (ragged S)

    def chunk_contrib(off):
        x = x_ref[:, off:off + chunk].astype(jnp.float32)     # (C, chunk)
        lbl = lbl_ref[:, off:off + chunk].astype(jnp.int32)   # (1, chunk)

        # Softmax over the channel (sublane) axis == softmax_helper (dim=1).
        x_max = jnp.max(x, axis=0, keepdims=True)
        e = jnp.exp(x - x_max)                                  # EUP
        se = jnp.sum(e, axis=0, keepdims=True)
        r = pl.reciprocal(se, approx=True)                      # EUP
        r = r * (2.0 - se * r)                                  # Newton -> ~f32
        p = e * r                                               # (C, chunk)

        c_idx = jax.lax.broadcasted_iota(jnp.int32, (c, chunk), 0)
        is_cls = c_idx == lbl                                   # (C, chunk)

        if need_mask:
            # Only traced when the last spatial tile is partial.  Select-based
            # masking keeps padded-lane garbage out of the sums (the per-lane
            # softmax keeps any NaN/Inf garbage local to invalid lanes).
            lane = jax.lax.broadcasted_iota(jnp.int32, (1, chunk), 1)
            valid = (s * tile_s + off + lane) < s_total
            sel = jnp.logical_and(is_cls, valid)
            tp_c = jnp.where(sel, p, 0.0)
            ps_c = jnp.where(valid, p, 0.0)
            cnt_c = jnp.where(sel, 1.0, 0.0)
        else:
            tp_c = jnp.where(is_cls, p, 0.0)
            ps_c = p
            cnt_c = jnp.where(is_cls, 1.0, 0.0)
        return fold(tp_c), fold(ps_c), fold(cnt_c)

    # Static (fully unrolled) chunk loop: accumulators stay in vregs.
    tp_acc, ps_acc, cnt_acc = chunk_contrib(0)
    for ci in range(1, n_chunks):
        tp_c, ps_c, cnt_c = chunk_contrib(ci * chunk)
        tp_acc = tp_acc + tp_c
        ps_acc = ps_acc + ps_c
        cnt_acc = cnt_acc + cnt_c

    # One tiny (C, acc_w) writeback per grid step.
    tp_ref[...] += tp_acc
    ps_ref[...] += ps_acc
    cnt_ref[...] += cnt_acc


def focal_tversky_loss(net_output, target, *, alpha=0.3, beta=0.7, smooth=1.0,
                       gamma=0.75, target_tile=32768, chunk=1024,
                       vmem_budget_bytes=12 * 1024 * 1024):
    """net_output: (B, C, H, W) float logits (any float dtype);
    target: (B, 1, H, W) or (B, H, W) integer label map.
    Matches FocalTversky_loss with TverskyLoss defaults: softmax nonlin,
    batch_dice=True, do_bg=True, smooth=1.0, square=False, no loss_mask."""
    B, C = net_output.shape[:2]
    S = 1
    for d in net_output.shape[2:]:
        S *= d

    # Free reshapes of the contiguous NCHW layout (no transpose / extra HBM
    # pass).  Logits keep their native dtype (e.g. bf16) to halve HBM traffic;
    # labels keep their native (narrow) int dtype and are upcast in-kernel.
    x3d = net_output.reshape(B, C, S)
    if not jnp.issubdtype(target.dtype, jnp.integer):
        target = target.astype(jnp.int32)
    lbl3d = target.reshape(B, 1, S)

    x_bytes = jnp.dtype(x3d.dtype).itemsize
    l_bytes = jnp.dtype(lbl3d.dtype).itemsize

    if S <= chunk:
        tile_s = S            # full dim -> no 128-divisibility requirement
        chunk = S
        n_chunks = 1
        need_mask = False
    else:
        # VMEM budget guard: double-buffered x + label input blocks must fit
        # the scoped-VMEM defaults on every generation (v5e 16 MiB, v7x 32 MiB).
        # TODO(synk): for extreme class counts (C*chunk blocks > budget), also
        # set CompilerParams(vmem_limit_bytes=...) instead of shrinking tiles.
        per_lane = 2 * (C * x_bytes + l_bytes)
        budget_tile = (vmem_budget_bytes // per_lane) // chunk * chunk
        tile_s = max(chunk, min(target_tile, budget_tile, (S // chunk) * chunk))
        n_chunks = tile_s // chunk
        need_mask = (S % tile_s) != 0
    n_s = pl.cdiv(S, tile_s)
    acc_w = 128 if chunk % 128 == 0 else 1

    kernel = functools.partial(
        _focal_tversky_partial_kernel, n_chunks=n_chunks, chunk=chunk,
        acc_w=acc_w, s_total=S, tile_s=tile_s, need_mask=need_mask)

    part_shape = jax.ShapeDtypeStruct((B, C, acc_w), jnp.float32)
    part_spec = pl.BlockSpec((None, C, acc_w), lambda b, s: (b, 0, 0))

    # TODO(synk): for batch-heavy / spatially-tiny workloads, block several
    # batch rows per grid step to amortize per-step overhead further.
    tp_b, ps_b, cnt_b = pl.pallas_call(
        kernel,
        out_shape=(part_shape, part_shape, part_shape),
        grid_spec=pltpu.PrefetchScalarGridSpec(
            num_scalar_prefetch=0,
            grid=(B, n_s),
            in_specs=[
                pl.BlockSpec((None, C, tile_s), lambda b, s: (b, 0, s)),
                pl.BlockSpec((None, 1, tile_s), lambda b, s: (b, 0, s)),
            ],
            out_specs=(part_spec, part_spec, part_spec),
        ),
        # Each batch row owns its output blocks -> "parallel" (sharded across
        # v7x's two TensorCores); the spatial axis accumulates into the
        # resident output blocks -> "arbitrary".
        compiler_params=pltpu.CompilerParams(
            dimension_semantics=("parallel", "arbitrary")),
    )(x3d, lbl3d)

    # O(C) Tversky / focal epilogue in plain JAX (batch_dice=True -> reduce
    # over batch + spatial; do_bg=True -> keep all classes).
    tp = jnp.sum(tp_b, axis=(0, 2))
    ps = jnp.sum(ps_b, axis=(0, 2))
    cnt = jnp.sum(cnt_b, axis=(0, 2))
    fp = ps - tp
    fn = cnt - tp
    tversky = (tp + smooth) / (tp + alpha * fp + beta * fn + smooth)
    # tversky_loss = 1 + (-mean); focal = tversky_loss ** gamma
    # (no clamping, matching the PyTorch module's exact semantics).
    return (1.0 - jnp.mean(tversky)) ** gamma


def _reference(net_output, target, *, alpha=0.3, beta=0.7, smooth=1.0,
               gamma=0.75):
    """Pure-JAX reference mirroring the PyTorch module (batch_dice=True,
    do_bg=True, square=False, softmax nonlin, no mask)."""
    p = jax.nn.softmax(net_output.astype(jnp.float32), axis=1)
    onehot = jax.nn.one_hot(target[:, 0].astype(jnp.int32),
                            net_output.shape[1], axis=1, dtype=jnp.float32)
    axes = (0, 2, 3)
    tp = jnp.sum(p * onehot, axes)
    fp = jnp.sum(p * (1.0 - onehot), axes)
    fn = jnp.sum((1.0 - p) * onehot, axes)
    tversky = (tp + smooth) / (tp + alpha * fp + beta * fn + smooth)
    return (1.0 - jnp.mean(tversky)) ** gamma


if __name__ == "__main__":
    key = jax.random.PRNGKey(0)

    # Case 1: module-sized example (single tile, single chunk, no masking).
    k_x, k_y, key = jax.random.split(key, 3)
    B, C, H, W = 2, 4, 16, 16
    net_output = jax.random.normal(k_x, (B, C, H, W), dtype=jnp.float32)
    target = jax.random.randint(k_y, (B, 1, H, W), 0, C, dtype=jnp.int32)
    loss = jax.block_until_ready(focal_tversky_loss(net_output, target))
    ref = jax.block_until_ready(_reference(net_output, target))
    assert jnp.allclose(loss, ref, atol=1e-4, rtol=1e-4), (loss, ref)

    # Case 2: exercises the multi-chunk unrolled loop + partial-tile masking.
    k_x, k_y, key = jax.random.split(key, 3)
    B, C, H, W = 2, 4, 48, 48   # S = 2304 -> tile_s = 2048, 2 chunks, masked
    net_output = jax.random.normal(k_x, (B, C, H, W), dtype=jnp.float32)
    target = jax.random.randint(k_y, (B, 1, H, W), 0, C, dtype=jnp.int32)
    loss = jax.block_until_ready(focal_tversky_loss(net_output, target))
    ref = jax.block_until_ready(_reference(net_output, target))
    assert jnp.allclose(loss, ref, atol=1e-4, rtol=1e-4), (loss, ref)

    print("KERNEL_OK")
</pallas_src>

<mosaic_0001>
module attributes {stable_mosaic.version = 11 : i64} {
  func.func @_focal_tversky_partial_kernel(%arg0: i32, %arg1: i32, %arg2: memref<1x4x256xf32, #tpu.memory_space<vmem>>, %arg3: memref<1x1x256xi32, #tpu.memory_space<vmem>>, %arg4: memref<1x4x128xf32, #tpu.memory_space<vmem>>, %arg5: memref<1x4x128xf32, #tpu.memory_space<vmem>>, %arg6: memref<1x4x128xf32, #tpu.memory_space<vmem>>) attributes {dimension_semantics = [#tpu.dimension_semantics<parallel>, #tpu.dimension_semantics<arbitrary>], iteration_bounds = array<i64: 2, 1>, scalar_prefetch = 0 : i64, scratch_operands = 0 : i64, tpu.core_type = #tpu.core_type<tc>, window_params = [{transform_indices = @transform_0, window_bounds = array<i64: 1, 4, 256>}, {transform_indices = @transform_1, window_bounds = array<i64: 1, 1, 256>}, {transform_indices = @transform_2, window_bounds = array<i64: 1, 4, 128>}, {transform_indices = @transform_3, window_bounds = array<i64: 1, 4, 128>}, {transform_indices = @transform_4, window_bounds = array<i64: 1, 4, 128>}]} {
    %c0_i32 = arith.constant 0 : i32
    %0 = arith.cmpi eq, %arg1, %c0_i32 : i32
    %1 = arith.extui %0 : i1 to i32
    %c0_i32_0 = arith.constant 0 : i32
    %2 = arith.cmpi ne, %1, %c0_i32_0 : i32
    scf.if %2 {
      %cst_29 = arith.constant 0.000000e+00 : f32
      %56 = vector.broadcast %cst_29 : f32 to vector<4x128xf32>
      %c0_30 = arith.constant 0 : index
      %c0_31 = arith.constant 0 : index
      %c0_32 = arith.constant 0 : index
      %57 = vector.load %arg4[%c0_30, %c0_31, %c0_32] : memref<1x4x128xf32, #tpu.memory_space<vmem>>, vector<1x4x128xf32>
      %58 = vector.shape_cast %57 : vector<1x4x128xf32> to vector<4x128xf32>
      %59 = vector.shape_cast %56 : vector<4x128xf32> to vector<1x4x128xf32>
      tpu.vector_store %arg4[%c0_30, %c0_31, %c0_32], %59 {strides = array<i32>} : memref<1x4x128xf32, #tpu.memory_space<vmem>>, vector<1x4x128xf32>,
      %cst_33 = arith.constant 0.000000e+00 : f32
      %60 = vector.broadcast %cst_33 : f32 to vector<4x128xf32>
      %c0_34 = arith.constant 0 : index
      %c0_35 = arith.constant 0 : index
      %c0_36 = arith.constant 0 : index
      %61 = vector.load %arg5[%c0_34, %c0_35, %c0_36] : memref<1x4x128xf32, #tpu.memory_space<vmem>>, vector<1x4x128xf32>
      %62 = vector.shape_cast %61 : vector<1x4x128xf32> to vector<4x128xf32>
      %63 = vector.shape_cast %60 : vector<4x128xf32> to vector<1x4x128xf32>
      tpu.vector_store %arg5[%c0_34, %c0_35, %c0_36], %63 {strides = array<i32>} : memref<1x4x128xf32, #tpu.memory_space<vmem>>, vector<1x4x128xf32>,
      %cst_37 = arith.constant 0.000000e+00 : f32
      %64 = vector.broadcast %cst_37 : f32 to vector<4x128xf32>
      %c0_38 = arith.constant 0 : index
      %c0_39 = arith.constant 0 : index
      %c0_40 = arith.constant 0 : index
      %65 = vector.load %arg6[%c0_38, %c0_39, %c0_40] : memref<1x4x128xf32, #tpu.memory_space<vmem>>, vector<1x4x128xf32>
      %66 = vector.shape_cast %65 : vector<1x4x128xf32> to vector<4x128xf32>
      %67 = vector.shape_cast %64 : vector<4x128xf32> to vector<1x4x128xf32>
      tpu.vector_store %arg6[%c0_38, %c0_39, %c0_40], %67 {strides = array<i32>} : memref<1x4x128xf32, #tpu.memory_space<vmem>>, vector<1x4x128xf32>,
    } else {
    }
    %c0 = arith.constant 0 : index
    %c0_1 = arith.constant 0 : index
    %c0_2 = arith.constant 0 : index
    %3 = vector.load %arg2[%c0, %c0_1, %c0_2] : memref<1x4x256xf32, #tpu.memory_space<vmem>>, vector<1x4x256xf32>
    %4 = vector.shape_cast %3 : vector<1x4x256xf32> to vector<4x256xf32>
    %c0_3 = arith.constant 0 : index
    %c0_4 = arith.constant 0 : index
    %c0_5 = arith.constant 0 : index
    %5 = vector.load %arg3[%c0_3, %c0_4, %c0_5] : memref<1x1x256xi32, #tpu.memory_space<vmem>>, vector<1x1x256xi32>
    %6 = vector.shape_cast %5 : vector<1x1x256xi32> to vector<1x256xi32>
    %cst = arith.constant dense<0xFF800000> : vector<256xf32>
    %7 = vector.multi_reduction <maximumf>, %4, %cst [0] : vector<4x256xf32> to vector<256xf32>
    %8 = vector.shape_cast %7 : vector<256xf32> to vector<1x256xf32>
    %9 = vector.broadcast %8 : vector<1x256xf32> to vector<4x256xf32>
    %10 = arith.subf %4, %9 : vector<4x256xf32>
    %11 = math.exp %10 : vector<4x256xf32>
    %cst_6 = arith.constant dense<0.000000e+00> : vector<256xf32>
    %12 = vector.multi_reduction <add>, %11, %cst_6 [0] : vector<4x256xf32> to vector<256xf32>
    %13 = vector.shape_cast %12 : vector<256xf32> to vector<1x256xf32>
    %14 = tpu.reciprocal %13 {approx = true} : vector<1x256xf32> -> vector<1x256xf32>
    %15 = arith.mulf %13, %14 : vector<1x256xf32>
    %cst_7 = arith.constant 2.000000e+00 : f32
    %16 = vector.broadcast %cst_7 : f32 to vector<1x256xf32>
    %17 = arith.subf %16, %15 : vector<1x256xf32>
    %18 = arith.mulf %14, %17 : vector<1x256xf32>
    %19 = vector.broadcast %18 : vector<1x256xf32> to vector<4x256xf32>
    %20 = arith.mulf %11, %19 : vector<4x256xf32>
    %21 = tpu.iota {dimensions = array<i32: 0>} : vector<4x256xi32>
    %22 = vector.broadcast %6 : vector<1x256xi32> to vector<4x256xi32>
    %23 = arith.cmpi eq, %21, %22 : vector<4x256xi32>
    %cst_8 = arith.constant 0.000000e+00 : f32
    %24 = vector.broadcast %cst_8 : f32 to vector<4x256xf32>
    %25 = arith.select %23, %20, %24 : vector<4x256xi1>, vector<4x256xf32>
    %cst_9 = arith.constant 1.000000e+00 : f32
    %cst_10 = arith.constant 0.000000e+00 : f32
    %26 = vector.broadcast %cst_9 : f32 to vector<4x256xf32>
    %27 = vector.broadcast %cst_10 : f32 to vector<4x256xf32>
    %28 = arith.select %23, %26, %27 : vector<4x256xi1>, vector<4x256xf32>
    %29 = vector.extract_strided_slice %25 {offsets = [0, 0], sizes = [4, 128], strides = [1, 1]} : vector<4x256xf32> to vector<4x128xf32>
    %30 = vector.extract_strided_slice %25 {offsets = [0, 128], sizes = [4, 128], strides = [1, 1]} : vector<4x256xf32> to vector<4x128xf32>
    %31 = arith.addf %29, %30 : vector<4x128xf32>
    %32 = vector.extract_strided_slice %20 {offsets = [0, 0], sizes = [4, 128], strides = [1, 1]} : vector<4x256xf32> to vector<4x128xf32>
    %33 = vector.extract_strided_slice %20 {offsets = [0, 128], sizes = [4, 128], strides = [1, 1]} : vector<4x256xf32> to vector<4x128xf32>
    %34 = arith.addf %32, %33 : vector<4x128xf32>
    %35 = vector.extract_strided_slice %28 {offsets = [0, 0], sizes = [4, 128], strides = [1, 1]} : vector<4x256xf32> to vector<4x128xf32>
    %36 = vector.extract_strided_slice %28 {offsets = [0, 128], sizes = [4, 128], strides = [1, 1]} : vector<4x256xf32> to vector<4x128xf32>
    %37 = arith.addf %35, %36 : vector<4x128xf32>
    %c0_11 = arith.constant 0 : index
    %c0_12 = arith.constant 0 : index
    %c0_13 = arith.constant 0 : index
    %38 = vector.load %arg4[%c0_11, %c0_12, %c0_13] : memref<1x4x128xf32, #tpu.memory_space<vmem>>, vector<1x4x128xf32>
    %39 = vector.shape_cast %38 : vector<1x4x128xf32> to vector<4x128xf32>
    %40 = arith.addf %39, %31 : vector<4x128xf32>
    %c0_14 = arith.constant 0 : index
    %c0_15 = arith.constant 0 : index
    %c0_16 = arith.constant 0 : index
    %41 = vector.load %arg4[%c0_14, %c0_15, %c0_16] : memref<1x4x128xf32, #tpu.memory_space<vmem>>, vector<1x4x128xf32>
    %42 = vector.shape_cast %41 : vector<1x4x128xf32> to vector<4x128xf32>
    %43 = vector.shape_cast %40 : vector<4x128xf32> to vector<1x4x128xf32>
    tpu.vector_store %arg4[%c0_14, %c0_15, %c0_16], %43 {strides = array<i32>} : memref<1x4x128xf32, #tpu.memory_space<vmem>>, vector<1x4x128xf32>,
    %c0_17 = arith.constant 0 : index
    %c0_18 = arith.constant 0 : index
    %c0_19 = arith.constant 0 : index
    %44 = vector.load %arg5[%c0_17, %c0_18, %c0_19] : memref<1x4x128xf32, #tpu.memory_space<vmem>>, vector<1x4x128xf32>
    %45 = vector.shape_cast %44 : vector<1x4x128xf32> to vector<4x128xf32>
    %46 = arith.addf %45, %34 : vector<4x128xf32>
    %c0_20 = arith.constant 0 : index
    %c0_21 = arith.constant 0 : index
    %c0_22 = arith.constant 0 : index
    %47 = vector.load %arg5[%c0_20, %c0_21, %c0_22] : memref<1x4x128xf32, #tpu.memory_space<vmem>>, vector<1x4x128xf32>
    %48 = vector.shape_cast %47 : vector<1x4x128xf32> to vector<4x128xf32>
    %49 = vector.shape_cast %46 : vector<4x128xf32> to vector<1x4x128xf32>
    tpu.vector_store %arg5[%c0_20, %c0_21, %c0_22], %49 {strides = array<i32>} : memref<1x4x128xf32, #tpu.memory_space<vmem>>, vector<1x4x128xf32>,
    %c0_23 = arith.constant 0 : index
    %c0_24 = arith.constant 0 : index
    %c0_25 = arith.constant 0 : index
    %50 = vector.load %arg6[%c0_23, %c0_24, %c0_25] : memref<1x4x128xf32, #tpu.memory_space<vmem>>, vector<1x4x128xf32>
    %51 = vector.shape_cast %50 : vector<1x4x128xf32> to vector<4x128xf32>
    %52 = arith.addf %51, %37 : vector<4x128xf32>
    %c0_26 = arith.constant 0 : index
    %c0_27 = arith.constant 0 : index
    %c0_28 = arith.constant 0 : index
    %53 = vector.load %arg6[%c0_26, %c0_27, %c0_28] : memref<1x4x128xf32, #tpu.memory_space<vmem>>, vector<1x4x128xf32>
    %54 = vector.shape_cast %53 : vector<1x4x128xf32> to vector<4x128xf32>
    %55 = vector.shape_cast %52 : vector<4x128xf32> to vector<1x4x128xf32>
    tpu.vector_store %arg6[%c0_26, %c0_27, %c0_28], %55 {strides = array<i32>} : memref<1x4x128xf32, #tpu.memory_space<vmem>>, vector<1x4x128xf32>,
    return
  }
  func.func @transform_0(%arg0: i32, %arg1: i32) -> (i32, i32, i32) {
    %c0_i32 = arith.constant 0 : i32
    %c0_i32_0 = arith.constant 0 : i32
    return %arg0, %c0_i32, %arg1 : i32, i32, i32
  }
  func.func @transform_1(%arg0: i32, %arg1: i32) -> (i32, i32, i32) {
    %c0_i32 = arith.constant 0 : i32
    %c0_i32_0 = arith.constant 0 : i32
    return %arg0, %c0_i32, %arg1 : i32, i32, i32
  }
  func.func @transform_2(%arg0: i32, %arg1: i32) -> (i32, i32, i32) {
    %c0_i32 = arith.constant 0 : i32
    %c0_i32_0 = arith.constant 0 : i32
    %c0_i32_1 = arith.constant 0 : i32
    return %arg0, %c0_i32, %c0_i32_0 : i32, i32, i32
  }
  func.func @transform_3(%arg0: i32, %arg1: i32) -> (i32, i32, i32) {
    %c0_i32 = arith.constant 0 : i32
    %c0_i32_0 = arith.constant 0 : i32
    %c0_i32_1 = arith.constant 0 : i32
    return %arg0, %c0_i32, %c0_i32_0 : i32, i32, i32
  }
  func.func @transform_4(%arg0: i32, %arg1: i32) -> (i32, i32, i32) {
    %c0_i32 = arith.constant 0 : i32
    %c0_i32_0 = arith.constant 0 : i32
    %c0_i32_1 = arith.constant 0 : i32
    return %arg0, %c0_i32, %c0_i32_0 : i32, i32, i32
  }
}

</mosaic_0001>

<llo_original>
// kernel: tpu_custom_call.1
$region0: #{tpu_custom_call.1}
  #allocation0 [shape = 'u32[]', space=smem, size = 0x4, offset = 0x4, fixed_abs, tag = 'smem constant byte address 0x4 - core index']
  #allocation1 [shape = 'u32[144,128]{1,0:T(1,128)}', space=vmem, size = 0x12000, scoped, tag = 'internal scratch']
  %s0 = inlined_call_operand.hbm [shape: f32[2,4,256], index: 0, kind: input, shape index: {}]
  %s1 = inlined_call_operand.hbm [shape: s32[2,1,256], index: 1, kind: input, shape index: {}]
  %s2 = inlined_call_operand.hbm [shape: f32[2,4,128], index: 2, kind: output, shape index: {0}]
  %s3 = inlined_call_operand.hbm [shape: f32[2,4,128], index: 3, kind: output, shape index: {1}]
  %s4 = inlined_call_operand.hbm [shape: f32[2,4,128], index: 4, kind: output, shape index: {2}]
  %5 = xla_tuple %s2, %s3, %s4
  %s6 = sld [smem:[#allocation0]]
  $region69: #{tpu_custom_call.1} parent=0
    _
  %s8 = ssub.s32 1, %s6
  %s9 = scalar_select 0, %s8, %s6
  $region1: #{tpu_custom_call.1} parent=0
    #allocation2 [shape = 'u8[8192]{0}', space=vmem, size = 0x2000, scoped, tag = 'input window, operand 0']
    #allocation3 [shape = 's32[2]{0}', space=sflag, size = 0x8, scoped, tag = 'scoped memory for tpu_custom_call.1']
    #allocation4 [shape = 's32[2]{0}', space=sflag, size = 0x8, scoped, tag = 'scoped memory for tpu_custom_call.1']
    #allocation5 [shape = 'u8[2048]{0}', space=vmem, size = 0x800, scoped, tag = 'input window, operand 1']
    #allocation6 [shape = 's32[2]{0}', space=sflag, size = 0x8, scoped, tag = 'scoped memory for tpu_custom_call.1']
    #allocation7 [shape = 'u8[4096]{0}', space=vmem, size = 0x1000, scoped, tag = 'output window, operand 0']
    #allocation8 [shape = 'u8[4096]{0}', space=vmem, size = 0x1000, scoped, tag = 'output window, operand 1']
    #allocation9 [shape = 's32[2]{0}', space=sflag, size = 0x8, scoped, tag = 'scoped memory for tpu_custom_call.1']
    #allocation10 [shape = 'u8[4096]{0}', space=vmem, size = 0x1000, scoped, tag = 'output window, operand 2']
    %10 = vsyncpa [#allocation3], 0
    %s11 = scalar_lea.sflag [#allocation3], 1
    %12 = vsyncpa %s11, 0
    %13 = vsyncpa [#allocation6], 0
    %s14 = scalar_lea.sflag [#allocation6], 1
    %15 = vsyncpa %s14, 0
    %16 = vsyncpa [#allocation4], 0
    %s17 = scalar_lea.sflag [#allocation4], 1
    %18 = vsyncpa %s17, 0
    %19 = vsyncpa [#allocation9], 0
    %s20 = scalar_lea.sflag [#allocation9], 1
    %21 = vsyncpa %s20, 0
    loop: start=0, step=1, limit=4
    $region2: #{tpu_custom_call.1} parent=1 // loop_pre_header
      _
    $region3: #{tpu_custom_call.1} parent=1 // loop_header
      %s23 = sphi 0, %s27
      %p24 = scmp.ge.s32.totalorder %s23, 4
      %s30 = sphi 0, %s42
      %s31 = sphi 0, %s38
      %s32 = sphi 0, %s30
      %s33 = sphi 0, %s31
      %s34 = sphi 0, %s32
      %s35 = sphi 0, %s33
      %s47 = sphi 0, %s49
      %s50 = sphi 0, %s47
      %s51 = sphi 0, %s50
      %s67 = sphi 0, %s51
      %s75 = sphi 0, %s77
      %s78 = sphi 0, %s75
      %s79 = sphi 0, %s78
      %s95 = sphi 0, %s79
      %s101 = sphi 0, %s103
      %s104 = sphi 0, %s101
      %s105 = sphi 0, %s104
      %s121 = sphi 0, %s105
      %s127 = sphi 0, %s129
      %s130 = sphi 0, %s127
      %s131 = sphi 0, %s130
      %s147 = sphi 0, %s131
      %s153 = sphi 0, %s155
      %s156 = sphi 0, %s153
      %s157 = sphi 0, %s156
      %s173 = sphi 0, %s157
    $region4: #{tpu_custom_call.1} parent=1 // loop_header_branch
      %26 = sbr.rel (%p24) target = $region8
    $region5: #{tpu_custom_call.1} parent=1 // loop_body
      %s28 = ssub.s32 %s23, 1
      %s29 = ssub.s32 %s23, 2
      %s36 = sadd.s32 1, %s31
      %p37 = scmp.ge.s32.totalorder %s36, 1
      %s38 = scalar_select %p37, 0, %s36
      %s39 = sadd.s32 1, %s30
      %s40 = scalar_select %p37, %s39, %s30
      %p41 = scmp.ge.s32.totalorder %s40, 2
      %s42 = scalar_select %p41, 0, %s40
      %s43 = ssub.s32 %s30, %s42
      %s44 = ssub.s32 %s31, %s38
      %s45 = sor.u32 %s43, %s44
      %p46 = scmp.eq.s32.totalorder %s45, 0
      %s48 = sadd.s32 %s47, 1
      %s49 = scalar_select %p46, %s47, %s48
      %p52 = pneg %p46
      %p53 = scmp.eq.s32.totalorder %s23, 1
      %p54 = por %p52, %p53
      %p55 = scmp.ne.s32.totalorder %s47, %s50
      %p56 = scmp.eq.s32.totalorder %s23, 0
      %p57 = por %p55, %p56
      %p58 = scmp.ne.s32.totalorder %s47, %s50
      %p59 = scmp.eq.s32.totalorder %s28, 1
      %p60 = por %p58, %p59
      %p61 = scmp.ne.s32.totalorder %s50, %s51
      %p62 = scmp.eq.s32.totalorder %s28, 0
      %p63 = por %p61, %p62
      %p64 = scmp.ne.s32.totalorder %s50, %s51
      %p65 = scmp.eq.s32.totalorder %s29, 1
      %p66 = por %p64, %p65
      %p68 = scmp.ne.s32.totalorder %s51, %s67
      %p69 = scmp.eq.s32.totalorder %s29, 0
      %p70 = por %p68, %p69
      %s71 = ssub.s32 %s30, %s42
      %s72 = ssub.s32 %s31, %s38
      %s73 = sor.u32 %s71, %s72
      %p74 = scmp.eq.s32.totalorder %s73, 0
      %s76 = sadd.s32 %s75, 1
      %s77 = scalar_select %p74, %s75, %s76
      %p80 = pneg %p74
      %p81 = scmp.eq.s32.totalorder %s23, 1
      %p82 = por %p80, %p81
      %p83 = scmp.ne.s32.totalorder %s75, %s78
      %p84 = scmp.eq.s32.totalorder %s23, 0
      %p85 = por %p83, %p84
      %p86 = scmp.ne.s32.totalorder %s75, %s78
      %p87 = scmp.eq.s32.totalorder %s28, 1
      %p88 = por %p86, %p87
      %p89 = scmp.ne.s32.totalorder %s78, %s79
      %p90 = scmp.eq.s32.totalorder %s28, 0
      %p91 = por %p89, %p90
      %p92 = scmp.ne.s32.totalorder %s78, %s79
      %p93 = scmp.eq.s32.totalorder %s29, 1
      %p94 = por %p92, %p93
      %p96 = scmp.ne.s32.totalorder %s79, %s95
      %p97 = scmp.eq.s32.totalorder %s29, 0
      %p98 = por %p96, %p97
      %s99 = ssub.s32 %s30, %s42
      %p100 = scmp.eq.s32.totalorder %s99, 0
      %s102 = sadd.s32 %s101, 1
      %s103 = scalar_select %p100, %s101, %s102
      %p106 = pneg %p100
      %p107 = scmp.eq.s32.totalorder %s23, 1
      %p108 = por %p106, %p107
      %p109 = scmp.ne.s32.totalorder %s101, %s104
      %p110 = scmp.eq.s32.totalorder %s23, 0
      %p111 = por %p109, %p110
      %p112 = scmp.ne.s32.totalorder %s101, %s104
      %p113 = scmp.eq.s32.totalorder %s28, 1
      %p114 = por %p112, %p113
      %p115 = scmp.ne.s32.totalorder %s104, %s105
      %p116 = scmp.eq.s32.totalorder %s28, 0
      %p117 = por %p115, %p116
      %p118 = scmp.ne.s32.totalorder %s104, %s105
      %p119 = scmp.eq.s32.totalorder %s29, 1
      %p120 = por %p118, %p119
      %p122 = scmp.ne.s32.totalorder %s105, %s121
      %p123 = scmp.eq.s32.totalorder %s29, 0
      %p124 = por %p122, %p123
      %s125 = ssub.s32 %s30, %s42
      %p126 = scmp.eq.s32.totalorder %s125, 0
      %s128 = sadd.s32 %s127, 1
      %s129 = scalar_select %p126, %s127, %s128
      %p132 = pneg %p126
      %p133 = scmp.eq.s32.totalorder %s23, 1
      %p134 = por %p132, %p133
      %p135 = scmp.ne.s32.totalorder %s127, %s130
      %p136 = scmp.eq.s32.totalorder %s23, 0
      %p137 = por %p135, %p136
      %p138 = scmp.ne.s32.totalorder %s127, %s130
      %p139 = scmp.eq.s32.totalorder %s28, 1
      %p140 = por %p138, %p139
      %p141 = scmp.ne.s32.totalorder %s130, %s131
      %p142 = scmp.eq.s32.totalorder %s28, 0
      %p143 = por %p141, %p142
      %p144 = scmp.ne.s32.totalorder %s130, %s131
      %p145 = scmp.eq.s32.totalorder %s29, 1
      %p146 = por %p144, %p145
      %p148 = scmp.ne.s32.totalorder %s131, %s147
      %p149 = scmp.eq.s32.totalorder %s29, 0
      %p150 = por %p148, %p149
      %s151 = ssub.s32 %s30, %s42
      %p152 = scmp.eq.s32.totalorder %s151, 0
      %s154 = sadd.s32 %s153, 1
      %s155 = scalar_select %p152, %s153, %s154
      %p158 = pneg %p152
      %p159 = scmp.eq.s32.totalorder %s23, 1
      %p160 = por %p158, %p159
      %p161 = scmp.ne.s32.totalorder %s153, %s156
      %p162 = scmp.eq.s32.totalorder %s23, 0
      %p163 = por %p161, %p162
      %p164 = scmp.ne.s32.totalorder %s153, %s156
      %p165 = scmp.eq.s32.totalorder %s28, 1
      %p166 = por %p164, %p165
      %p167 = scmp.ne.s32.totalorder %s156, %s157
      %p168 = scmp.eq.s32.totalorder %s28, 0
      %p169 = por %p167, %p168
      %p170 = scmp.ne.s32.totalorder %s156, %s157
      %p171 = scmp.eq.s32.totalorder %s29, 1
      %p172 = por %p170, %p171
      %p174 = scmp.ne.s32.totalorder %s157, %s173
      %p175 = scmp.eq.s32.totalorder %s29, 0
      %p176 = por %p174, %p175
      %p177 = scmp.le.s32.totalorder 1, %s23
      %p178 = scmp.lt.s32.totalorder %s23, 3
      %p179 = pnand %p177, %p178
      %p180 = pneg %p179
      // Predicated region
      $region9: #{tpu_custom_call.1} parent=5 // pred_check
        _
      $region10: #{tpu_custom_call.1} parent=5 // pred_check_branch
        %182 = sbr.rel (%p179) target = $region12
      $region11: #{tpu_custom_call.1} parent=5 // pred_region
        %s183 = ssub.s32 %s23, 1
      $region12: #{tpu_custom_call.1} parent=5 // pred_fallthru
        _
      %p184 = scmp.lt.s32.totalorder %s23, 2
      // Predicated region
      $region13: #{tpu_custom_call.1} parent=5 // pred_check
        %p185 = pneg %p184
      $region14: #{tpu_custom_call.1} parent=5 // pred_check_branch
        %187 = sbr.rel (%p185) target = $region16
      $region15: #{tpu_custom_call.1} parent=5 // pred_region
        // Predicated region
        $region17: #{tpu_custom_call.1} parent=15 // pred_check
          %p188 = pneg %p57
        $region18: #{tpu_custom_call.1} parent=15 // pred_check_branch
          %190 = sbr.rel (%p188) target = $region20
        $region19: #{tpu_custom_call.1} parent=15 // pred_region
          %s191 = sand.u32 %s47, 1
          %s192 = scalar_lea.sflag [#allocation3], %s191
          %s193 = sand.u32 %s47, 1
          %s194 = smul.addr %s193, 8
          %s195 = scalar_lea.vmem [#allocation2], %s194
          %s196 = smul.u32 2, %s31
          %s198 = ssub.s32 128, 128
          %199 = vsyncadd %s192, %s198
          %s200 = smul.addr %s30, 2
          %s201 = sadd.s32 %s196, %s200
          %s202 = smul.addr %s201, 64
          %s203 = scalar_lea.hbm %s0, %s202
          %s205 = sshll.u32 %s195, 4
          %s206 = int_to_ptr.vmem [resolvable:$true] %s205
          %208 = dma.hbm_to_vmem [thread:$0]  %s203, 128, %s206, %s192
        $region20: #{tpu_custom_call.1} parent=15 // pred_fallthru
          _
        // Predicated region
        $region21: #{tpu_custom_call.1} parent=15 // pred_check
          %p209 = pneg %p85
        $region22: #{tpu_custom_call.1} parent=15 // pred_check_branch
          %211 = sbr.rel (%p209) target = $region24
        $region23: #{tpu_custom_call.1} parent=15 // pred_region
          %s212 = sand.u32 %s75, 1
          %s213 = scalar_lea.sflag [#allocation6], %s212
          %s214 = sand.u32 %s75, 1
          %s215 = smul.addr %s214, 2
          %s216 = scalar_lea.vmem [#allocation5], %s215
          %s217 = smul.u32 2, %s31
          %s219 = ssub.s32 32, 32
          %220 = vsyncadd %s213, %s219
          %s221 = smul.addr %s30, 2
          %s222 = sadd.s32 %s217, %s221
          %s223 = smul.addr %s222, 16
          %s224 = scalar_lea.hbm %s1, %s223
          %s226 = sshll.u32 %s216, 4
          %s227 = int_to_ptr.vmem [resolvable:$true] %s226
          %229 = dma.hbm_to_vmem [thread:$0]  %s224, 32, %s227, %s213
        $region24: #{tpu_custom_call.1} parent=15 // pred_fallthru
          _
      $region16: #{tpu_custom_call.1} parent=5 // pred_fallthru
        _
      %p230 = scmp.le.s32.totalorder 1, %s23
      %p231 = scmp.lt.s32.totalorder %s23, 3
      %p232 = pnand %p230, %p231
      %p233 = pneg %p232
      // Predicated region
      $region25: #{tpu_custom_call.1} parent=5 // pred_check
        _
      $region26: #{tpu_custom_call.1} parent=5 // pred_check_branch
        %235 = sbr.rel (%p232) target = $region28
      $region27: #{tpu_custom_call.1} parent=5 // pred_region
        %s236 = ssub.s32 %s23, 1
        %s237 = sand.u32 %s50, 1
        %s238 = scalar_lea.sflag [#allocation3], %s237
        %s239 = sand.u32 %s50, 1
        %s240 = smul.addr %s239, 8
        %s241 = scalar_lea.vmem [#allocation2], %s240
        // Predicated region
        $region29: #{tpu_custom_call.1} parent=27 // pred_check
          %p242 = pneg %p63
        $region30: #{tpu_custom_call.1} parent=27 // pred_check_branch
          %244 = sbr.rel (%p242) target = $region32
        $region31: #{tpu_custom_call.1} parent=27 // pred_region
          %245 = dma.done %s238, 128
        $region32: #{tpu_custom_call.1} parent=27 // pred_fallthru
          _
        %s246 = sand.u32 %s78, 1
        %s247 = scalar_lea.sflag [#allocation6], %s246
        %s248 = sand.u32 %s78, 1
        %s249 = smul.addr %s248, 2
        %s250 = scalar_lea.vmem [#allocation5], %s249
        // Predicated region
        $region33: #{tpu_custom_call.1} parent=27 // pred_check
          %p251 = pneg %p91
        $region34: #{tpu_custom_call.1} parent=27 // pred_check_branch
          %253 = sbr.rel (%p251) target = $region36
        $region35: #{tpu_custom_call.1} parent=27 // pred_region
          %254 = dma.done %s247, 32
        $region36: #{tpu_custom_call.1} parent=27 // pred_fallthru
          _
        %s255 = sand.u32 %s50, 1
        %s256 = scalar_lea.sflag [#allocation3], %s255
        %s257 = sand.u32 %s50, 1
        %s258 = smul.addr %s257, 8
        %s259 = scalar_lea.vmem [#allocation2], %s258
        %p260 = pneg %p63
        %p261 = pneg %p60
        %s262 = sand.u32 %s78, 1
        %s263 = scalar_lea.sflag [#allocation6], %s262
        %s264 = sand.u32 %s78, 1
        %s265 = smul.addr %s264, 2
        %s266 = scalar_lea.vmem [#allocation5], %s265
        %p267 = pneg %p91
        %p268 = pneg %p88
        %p269 = pneg %p117
        %p270 = pneg %p114
        %s271 = sand.u32 %s104, 1
        %s272 = scalar_lea.sflag [#allocation4], %s271
        %s273 = sand.u32 %s104, 1
        %s274 = smul.addr %s273, 4
        %s275 = scalar_lea.vmem [#allocation7], %s274
        %p276 = pneg %p143
        %p277 = pneg %p140
        %s278 = sand.u32 %s28, 1
        %s279 = scalar_lea.sflag [#allocation9], %s278
        %s280 = sand.u32 %s130, 1
        %s281 = smul.addr %s280, 4
        %s282 = scalar_lea.vmem [#allocation8], %s281
        %p283 = pneg %p169
        %p284 = pneg %p166
        %s285 = sand.u32 %s28, 1
        %s286 = scalar_lea.sflag [#allocation9], %s285
        %s287 = sand.u32 %s156, 1
        %s288 = smul.addr %s287, 4
        %s289 = scalar_lea.vmem [#allocation10], %s288
        %s290 = smul.u32 2, %s33
        %s291 = smul.u32 2, %s33
        %p292 = scmp.eq.s32.totalorder %s33, 0
        // Predicated region
        $region37: #{tpu_custom_call.1} parent=27 // pred_check
          %p293 = pneg %p292
        $region38: #{tpu_custom_call.1} parent=27 // pred_check_branch
          %295 = sbr.rel (%p293) target = $region40
        $region39: #{tpu_custom_call.1} parent=27 // pred_region
          %296 = vst [vmem:[%s275] sm:$0xf] 0.0
          %297 = vst [vmem:[%s282] sm:$0xf] 0.0
          %298 = vst [vmem:[%s289] sm:$0xf] 0.0
        $region40: #{tpu_custom_call.1} parent=27 // pred_fallthru
          _
        %v299 = vld [vmem:[%s241] sm:$0xff]
        %v300 = vld [vmem:[%s250] sm:$0x3]
        %v302 = vcombine.high %v299, %v299
        %vm304 = vcmask 1043456
        %v305 = vsel %vm304, %v299, -inf
        %v306 = vrot.slane %v305, 4
        %v307 = vmax.f32 %v305, %v306
        %v308 = vrot.slane %v307, 2
        %v309 = vmax.f32 %v307, %v308
        %v310 = vrot.slane %v309, 1
        %v311 = vmax.f32 %v309, %v310
        %v312 = vsel %vm304, %v302, -inf
        %v313 = vrot.slane %v312, 4
        %v314 = vmax.f32 %v312, %v313
        %v315 = vrot.slane %v314, 2
        %v316 = vmax.f32 %v314, %v315
        %v317 = vrot.slane %v316, 1
        %v318 = vmax.f32 %v316, %v317
        %v321 = vcombine.low %v311, %v318
        %v323 = vsub.f32 %v299, %v321
        %v324 = vmul.f32 %v323, 1.442695
        %v325 = vpow.pop %v324
        %v327 = vcombine.high %v325, %v325
        %v329 = vsel %vm304, %v325, 0.0
        %v330 = vrot.slane %v329, 4
        %v331 = vadd.f32 %v329, %v330
        %v332 = vrot.slane %v331, 2
        %v333 = vadd.f32 %v331, %v332
        %v334 = vrot.slane %v333, 1
        %v335 = vadd.f32 %v333, %v334
        %v336 = vsel %vm304, %v327, 0.0
        %v337 = vrot.slane %v336, 4
        %v338 = vadd.f32 %v336, %v337
        %v339 = vrot.slane %v338, 2
        %v340 = vadd.f32 %v338, %v339
        %v341 = vrot.slane %v340, 1
        %v342 = vadd.f32 %v340, %v341
        %v343 = vrcp.pop %v335
        %v344 = vrcp.pop %v342
        %v345 = vmul.f32 %v335, %v343
        %v346 = vmul.f32 %v342, %v344
        %v347 = vsub.f32 2.0, %v345
        %v348 = vsub.f32 2.0, %v346
        %v349 = vmul.f32 %v343, %v347
        %v350 = vmul.f32 %v344, %v348
        %v353 = vcombine.low %v349, %v350
        %v355 = vmul.f32 %v325, %v353
        %v356 = vlaneseq
        %v357 = vshrl.u32 %v356, 7
        %v358 = vlaneseq
        %v359 = vshrl.u32 %v358, 7
        %v360 = vsub.s32 0, %v359
        %v361 = vrot.slane %v300, %v360
        %v362 = vlaneseq
        %v363 = vshrl.u32 %v362, 7
        %v364 = vsub.s32 1, %v363
        %v365 = vrot.slane %v300, %v364
        %vm366 = vcmp.eq.s32.totalorder %v357, %v361
        %vm367 = vcmp.eq.s32.totalorder %v357, %v365
        %v369 = vcombine.high %v355, %v355
        %v371 = vsel %vm366, %v355, 0.0
        %v372 = vsel %vm367, %v369, 0.0
        %v373 = vsel %vm366, 1.0, 0.0
        %v374 = vsel %vm367, 1.0, 0.0
        %v375 = vadd.f32 %v371, %v372
        %v376 = vrot.slane %v355, 4
        %v378 = vadd.f32 %v355, %v376
        %v379 = vadd.f32 %v373, %v374
        %v380 = vld [vmem:[%s275] sm:$0xf]
        %v381 = vadd.f32 %v380, %v375
        %382 = vst [vmem:[%s275] sm:$0xf] %v381
        %v383 = vld [vmem:[%s282] sm:$0xf]
        %v384 = vadd.f32 %v383, %v378
        %385 = vst [vmem:[%s282] sm:$0xf] %v384
        %v386 = vld [vmem:[%s289] sm:$0xf]
        %v387 = vadd.f32 %v386, %v379
        %388 = vst [vmem:[%s289] sm:$0xf] %v387
        %s389 = sand.u32 %s104, 1
        %s390 = scalar_lea.sflag [#allocation4], %s389
        %s391 = sand.u32 %s104, 1
        %s392 = smul.addr %s391, 4
        %s393 = scalar_lea.vmem [#allocation7], %s392
        %s394 = sand.u32 %s28, 1
        %s395 = scalar_lea.sflag [#allocation9], %s394
        %s396 = sand.u32 %s130, 1
        %s397 = smul.addr %s396, 4
        %s398 = scalar_lea.vmem [#allocation8], %s397
        %s399 = sand.u32 %s28, 1
        %s400 = scalar_lea.sflag [#allocation9], %s399
        %s401 = sand.u32 %s156, 1
        %s402 = smul.addr %s401, 4
        %s403 = scalar_lea.vmem [#allocation10], %s402
        // Predicated region
        $region41: #{tpu_custom_call.1} parent=27 // pred_check
          %p404 = pneg %p114
        $region42: #{tpu_custom_call.1} parent=27 // pred_check_branch
          %406 = sbr.rel (%p404) target = $region44
        $region43: #{tpu_custom_call.1} parent=27 // pred_region
          %s408 = ssub.s32 64, 64
          %409 = vsyncadd %s390, %s408
          %s410 = smul.addr %s32, 64
          %s411 = scalar_lea.hbm %s2, %s410
          %s413 = sshll.u32 %s393, 4
          %s414 = int_to_ptr.vmem [resolvable:$true] %s413
          %416 = dma.vmem_to_hbm [thread:$0]  %s414, 64, %s411, %s390
        $region44: #{tpu_custom_call.1} parent=27 // pred_fallthru
          _
        // Predicated region
        $region45: #{tpu_custom_call.1} parent=27 // pred_check
          %p417 = pneg %p140
        $region46: #{tpu_custom_call.1} parent=27 // pred_check_branch
          %419 = sbr.rel (%p417) target = $region48
        $region47: #{tpu_custom_call.1} parent=27 // pred_region
          %s421 = ssub.s32 64, 64
          %422 = vsyncadd %s395, %s421
          %s423 = smul.addr %s32, 64
          %s424 = scalar_lea.hbm %s3, %s423
          %s426 = sshll.u32 %s398, 4
          %s427 = int_to_ptr.vmem [resolvable:$true] %s426
          %429 = dma.vmem_to_hbm [thread:$0]  %s427, 64, %s424, %s395
        $region48: #{tpu_custom_call.1} parent=27 // pred_fallthru
          _
        // Predicated region
        $region49: #{tpu_custom_call.1} parent=27 // pred_check
          %p430 = pneg %p166
        $region50: #{tpu_custom_call.1} parent=27 // pred_check_branch
          %432 = sbr.rel (%p430) target = $region52
        $region51: #{tpu_custom_call.1} parent=27 // pred_region
          %s434 = ssub.s32 64, 64
          %435 = vsyncadd %s400, %s434
          %s436 = smul.addr %s32, 64
          %s437 = scalar_lea.hbm %s4, %s436
          %s439 = sshll.u32 %s403, 4
          %s440 = int_to_ptr.vmem [resolvable:$true] %s439
          %442 = dma.vmem_to_hbm [thread:$0]  %s440, 64, %s437, %s400
        $region52: #{tpu_custom_call.1} parent=27 // pred_fallthru
          _
      $region28: #{tpu_custom_call.1} parent=5 // pred_fallthru
        _
      %p443 = scmp.le.s32.totalorder 2, %s23
      // Predicated region
      $region53: #{tpu_custom_call.1} parent=5 // pred_check
        %p444 = pneg %p443
      $region54: #{tpu_custom_call.1} parent=5 // pred_check_branch
        %446 = sbr.rel (%p444) target = $region56
      $region55: #{tpu_custom_call.1} parent=5 // pred_region
        %s447 = ssub.s32 %s23, 2
        // Predicated region
        $region57: #{tpu_custom_call.1} parent=55 // pred_check
          %p448 = pneg %p120
        $region58: #{tpu_custom_call.1} parent=55 // pred_check_branch
          %450 = sbr.rel (%p448) target = $region60
        $region59: #{tpu_custom_call.1} parent=55 // pred_region
          %s451 = sand.u32 %s105, 1
          %s452 = scalar_lea.sflag [#allocation4], %s451
          %s453 = sand.u32 %s105, 1
          %s454 = smul.addr %s453, 4
          %s455 = scalar_lea.vmem [#allocation7], %s454
          %456 = dma.done %s452, 64
        $region60: #{tpu_custom_call.1} parent=55 // pred_fallthru
          _
        // Predicated region
        $region61: #{tpu_custom_call.1} parent=55 // pred_check
          %p457 = pneg %p146
        $region62: #{tpu_custom_call.1} parent=55 // pred_check_branch
          %459 = sbr.rel (%p457) target = $region64
        $region63: #{tpu_custom_call.1} parent=55 // pred_region
          %s460 = sand.u32 %s29, 1
          %s461 = scalar_lea.sflag [#allocation9], %s460
          %s462 = sand.u32 %s131, 1
          %s463 = smul.addr %s462, 4
          %s464 = scalar_lea.vmem [#allocation8], %s463
          %465 = dma.done %s461, 64
        $region64: #{tpu_custom_call.1} parent=55 // pred_fallthru
          _
        // Predicated region
        $region65: #{tpu_custom_call.1} parent=55 // pred_check
          %p466 = pneg %p172
        $region66: #{tpu_custom_call.1} parent=55 // pred_check_branch
          %468 = sbr.rel (%p466) target = $region68
        $region67: #{tpu_custom_call.1} parent=55 // pred_region
          %s469 = sand.u32 %s29, 1
          %s470 = scalar_lea.sflag [#allocation9], %s469
          %s471 = sand.u32 %s157, 1
          %s472 = smul.addr %s471, 4
          %s473 = scalar_lea.vmem [#allocation10], %s472
          %474 = dma.done %s470, 64
        $region68: #{tpu_custom_call.1} parent=55 // pred_fallthru
          _
      $region56: #{tpu_custom_call.1} parent=5 // pred_fallthru
        _
    $region6: #{tpu_custom_call.1} parent=1 // loop_footer
      %s27 = sadd.s32 1, %s23
    $region7: #{tpu_custom_call.1} parent=1 // loop_footer_branch
      %22 = sbr.rel target = $region3
    $region8: #{tpu_custom_call.1} parent=1 // loop_exit
      _
    %475 = vsyncpa [#allocation3], 1
    %s476 = scalar_lea.sflag [#allocation3], 1
    %477 = vsyncpa %s476, 1
    %478 = vsyncpa [#allocation6], 1
    %s479 = scalar_lea.sflag [#allocation6], 1
    %480 = vsyncpa %s479, 1
    %481 = vsyncpa [#allocation4], 1
    %s482 = scalar_lea.sflag [#allocation4], 1
    %483 = vsyncpa %s482, 1
    %484 = vsyncpa [#allocation9], 1
    %s485 = scalar_lea.sflag [#allocation9], 1
    %486 = vsyncpa %s485, 1

</llo_original>
